<compile_context>
chip_gen: v6e
topology: v6e:2x2x1
jax: 0.10.0
libtpu: 0.0.40
codegen_flags: <defaults>
</compile_context>

<pallas_src>
import functools

import jax
import jax.numpy as jnp
from jax.experimental import pallas as pl
from jax.experimental.pallas import tpu as pltpu


# -----------------------------------------------------------------------------
# Pallas kernel: conv1(as matmul) -> relu -> conv2 -> relu -> fc -> log_softmax
# for one batch tile of B_TILE elements.
# -----------------------------------------------------------------------------
def _pscn_kernel(a_ref, w1_ref, b1_ref, w2_ref, b2_ref, wfc_ref, bfc_ref,
                 o_ref, h2w_ref):
    # a_ref block: (B_TILE*seq, K) with rows ordered (batch-in-tile, t)
    h1 = jnp.dot(a_ref[...], w1_ref[...], preferred_element_type=jnp.float32)
    h1 = jnp.maximum(h1 + b1_ref[...], 0.0)                   # (B_TILE*seq, n1)

    h2 = jnp.dot(h1, w2_ref[...], preferred_element_type=jnp.float32)
    h2 = jnp.maximum(h2 + b2_ref[...], 0.0)                   # (B_TILE*seq, n2)

    # dropout: eval mode (training=False) -> identity

    # Regroup (B_TILE*seq, n2) -> (B_TILE, seq*n2) through VMEM scratch.
    # The reshape below only splits the leading dim (layout-free); the `seq`
    # lane-offset stores are independent of each other (no dependent MXU chain).
    n2 = h2.shape[1]
    seq = h2w_ref.shape[1] // n2
    bt = h2.shape[0] // seq
    h2_3d = h2.reshape(bt, seq, n2)
    for t in range(seq):
        h2w_ref[:, t * n2:(t + 1) * n2] = h2_3d[:, t, :]

    # Single fc contraction over seq*n2 with a lane-dense (padded) output.
    y = jnp.dot(h2w_ref[...], wfc_ref[...], preferred_element_type=jnp.float32)
    y = y + bfc_ref[...]                                      # (B_TILE, n3p)

    # log_softmax: padded classes carry a -1e30 bias so exp() underflows to 0.
    m = jnp.max(y, axis=-1, keepdims=True)
    z = y - m
    lse = jnp.log(jnp.sum(jnp.exp(z), axis=-1, keepdims=True))
    o_ref[...] = (z - lse).astype(o_ref.dtype)


def _pick_batch_tile(bs, seq):
    """Largest multiple-of-8 divisor of bs with bt*seq ~ 128; else bt = bs."""
    cap = max(8, 128 // max(seq, 1))
    cands = [d for d in range(8, cap + 1, 8) if bs % d == 0]
    return max(cands) if cands else bs


def pscn_pallas(a2, w1t, b1, w2t, b2, wfc, bfc, *, seq, batch_tile=None):
    """a2: (bs*seq, K), w1t: (K, n1), w2t: (n1, n2), wfc: (seq*n2, n3p)."""
    m, K = a2.shape
    bs = m // seq
    n1 = w1t.shape[1]
    n2 = w2t.shape[1]
    n3p = wfc.shape[1]

    bt = batch_tile if batch_tile is not None else _pick_batch_tile(bs, seq)
    assert bs % bt == 0, (bs, bt)
    grid = (bs // bt,)

    grid_spec = pltpu.PrefetchScalarGridSpec(
        num_scalar_prefetch=0,
        grid=grid,
        in_specs=[
            pl.BlockSpec((bt * seq, K), lambda i: (i, 0)),
            # Weights/biases: constant index maps -> resident across grid steps.
            pl.BlockSpec((K, n1), lambda i: (0, 0)),
            pl.BlockSpec((1, n1), lambda i: (0, 0)),
            pl.BlockSpec((n1, n2), lambda i: (0, 0)),
            pl.BlockSpec((1, n2), lambda i: (0, 0)),
            pl.BlockSpec((seq * n2, n3p), lambda i: (0, 0)),
            pl.BlockSpec((1, n3p), lambda i: (0, 0)),
        ],
        out_specs=pl.BlockSpec((bt, n3p), lambda i: (i, 0)),
        scratch_shapes=[pltpu.VMEM((bt, seq * n2), jnp.float32)],
    )
    return pl.pallas_call(
        _pscn_kernel,
        out_shape=jax.ShapeDtypeStruct((bs, n3p), jnp.float32),
        grid_spec=grid_spec,
        compiler_params=pltpu.CompilerParams(
            dimension_semantics=("parallel",)),
    )(a2, w1t, b1, w2t, b2, wfc, bfc)


# -----------------------------------------------------------------------------
# Module-level glue (embedding lookup, gather, im2col, weight permutations)
# -----------------------------------------------------------------------------
def batch_pscn_forward(params, x, vertices, recep, *, neighbor_size,
                       sequence_size, batch_tile=None):
    """Mirrors BatchPSCN.forward (inst_norm=False, use_vertex_feature=True)."""
    emb = params["emb_weight"][vertices]                  # (bs, n, emb_dim)
    x = jnp.concatenate([x, emb], axis=2)
    vfeat = params["vfeat_weight"][vertices]              # (bs, n, vf_dim)
    x = jnp.concatenate([x, vfeat], axis=2)               # (bs, n, f0)

    bs, l = recep.shape
    f0 = x.shape[2]
    nbr, seq = neighbor_size, sequence_size
    assert l == nbr * seq

    # index_select with per-batch offset == per-batch gather
    xg = x[jnp.arange(bs)[:, None], recep, :]             # (bs, l, f0)

    # im2col for conv1 (kernel == stride == nbr):
    #   A[b, t, c*nbr + j] = xg[b, t*nbr + j, c]
    a = xg.reshape(bs, seq, nbr, f0).transpose(0, 1, 3, 2).reshape(
        bs, seq, f0 * nbr)
    a2 = a.reshape(bs * seq, f0 * nbr)                    # batch*seq on rows

    n1 = params["conv1_w"].shape[0]
    n2 = params["conv2_w"].shape[0]
    n3 = params["fc_w"].shape[0]
    n3p = ((n3 + 127) // 128) * 128                       # lane-dense output

    w1t = params["conv1_w"].reshape(n1, f0 * nbr).T       # (f0*nbr, n1)
    b1 = params["conv1_b"].reshape(1, n1)
    w2t = params["conv2_w"][:, :, 0].T                    # (n1, n2)
    b2 = params["conv2_b"].reshape(1, n2)

    # fc weight indexed by (o*seq + t); flatten to (seq*n2, n3) with row t*n2+o,
    # then pad columns to n3p (zeros) and bias to n3p (-1e30 -> softmax-neutral).
    wfc_flat = params["fc_w"].reshape(n3, n2, seq).transpose(2, 1, 0).reshape(
        seq * n2, n3)
    wfc_p = jnp.zeros((seq * n2, n3p), jnp.float32).at[:, :n3].set(wfc_flat)
    bfc_p = jnp.full((1, n3p), -1e30, jnp.float32).at[0, :n3].set(
        params["fc_b"])

    out = pscn_pallas(a2, w1t, b1, w2t, b2, wfc_p, bfc_p,
                      seq=seq, batch_tile=batch_tile)
    return out[:, :n3]


# -----------------------------------------------------------------------------
# Pure-JAX reference (mirrors the PyTorch op sequence) for a sanity check
# -----------------------------------------------------------------------------
def batch_pscn_reference(params, x, vertices, recep, *, neighbor_size,
                         sequence_size):
    emb = params["emb_weight"][vertices]
    x = jnp.concatenate([x, emb], axis=2)
    vfeat = params["vfeat_weight"][vertices]
    x = jnp.concatenate([x, vfeat], axis=2)

    bs, l = recep.shape
    f0 = x.shape[2]
    nbr, seq = neighbor_size, sequence_size

    xg = x[jnp.arange(bs)[:, None], recep, :]             # (bs, l, f0)
    xt = xg.transpose(0, 2, 1)                            # (bs, f0, l)  NCW
    xwin = xt.reshape(bs, f0, seq, nbr)

    h1 = jnp.einsum("ocj,bctj->bot", params["conv1_w"], xwin)
    h1 = jax.nn.relu(h1 + params["conv1_b"][None, :, None])
    h2 = jnp.einsum("po,bot->bpt", params["conv2_w"][:, :, 0], h1)
    h2 = jax.nn.relu(h2 + params["conv2_b"][None, :, None])
    flat = h2.reshape(bs, -1)                             # channel-major
    y = flat @ params["fc_w"].T + params["fc_b"]
    return jax.nn.log_softmax(y, axis=-1)


# -----------------------------------------------------------------------------
# Main
# -----------------------------------------------------------------------------
if __name__ == "__main__":
    # Module configuration (inst_norm=False, use_vertex_feature=True)
    bs, n_nodes = 64, 16
    feat_dim = 8
    emb_vocab, emb_dim = 32, 16
    vf_dim = 8
    neighbor_size, sequence_size = 4, 8
    l = neighbor_size * sequence_size
    # n_units = [feat_dim, n1, n2, n3]; n_units[0] += emb_dim + vf_dim
    n1, n2, n3 = 32, 32, 16
    f0 = feat_dim + emb_dim + vf_dim                      # 32

    key = jax.random.PRNGKey(0)
    ks = jax.random.split(key, 12)

    params = {
        "emb_weight": jax.random.normal(ks[0], (emb_vocab, emb_dim),
                                        jnp.float32) * 0.1,
        "vfeat_weight": jax.random.normal(ks[1], (emb_vocab, vf_dim),
                                          jnp.float32) * 0.1,
        "conv1_w": jax.random.normal(ks[2], (n1, f0, neighbor_size),
                                     jnp.float32) * 0.1,
        "conv1_b": jax.random.normal(ks[3], (n1,), jnp.float32) * 0.1,
        "conv2_w": jax.random.normal(ks[4], (n2, n1, 1), jnp.float32) * 0.1,
        "conv2_b": jax.random.normal(ks[5], (n2,), jnp.float32) * 0.1,
        "fc_w": jax.random.normal(ks[6], (n3, n2 * sequence_size),
                                  jnp.float32) * 0.1,
        "fc_b": jax.random.normal(ks[7], (n3,), jnp.float32) * 0.1,
    }

    x = jax.random.normal(ks[8], (bs, n_nodes, feat_dim), jnp.float32)
    vertices = jax.random.randint(ks[9], (bs, n_nodes), 0, emb_vocab,
                                  dtype=jnp.int32)
    recep = jax.random.randint(ks[10], (bs, l), 0, n_nodes, dtype=jnp.int32)

    fwd = functools.partial(batch_pscn_forward,
                            neighbor_size=neighbor_size,
                            sequence_size=sequence_size,
                            batch_tile=16)   # grid=4 tiles, M = 16*8 = 128
    out = jax.jit(fwd)(params, x, vertices, recep)
    out = jax.block_until_ready(out)

    ref = batch_pscn_reference(params, x, vertices, recep,
                               neighbor_size=neighbor_size,
                               sequence_size=sequence_size)
    assert out.shape == (bs, n3)
    assert jnp.allclose(out, ref, atol=2e-4, rtol=2e-4), (out, ref)

    print("KERNEL_OK")
</pallas_src>

<mosaic_0001>
module attributes {stable_mosaic.version = 11 : i64} {
  func.func @_pscn_kernel(%arg0: i32, %arg1: memref<128x128xf32, #tpu.memory_space<vmem>>, %arg2: memref<128x32xf32, #tpu.memory_space<vmem>>, %arg3: memref<1x32xf32, #tpu.memory_space<vmem>>, %arg4: memref<32x32xf32, #tpu.memory_space<vmem>>, %arg5: memref<1x32xf32, #tpu.memory_space<vmem>>, %arg6: memref<256x128xf32, #tpu.memory_space<vmem>>, %arg7: memref<1x128xf32, #tpu.memory_space<vmem>>, %arg8: memref<16x128xf32, #tpu.memory_space<vmem>>, %arg9: memref<16x256xf32, #tpu.memory_space<vmem>>) attributes {dimension_semantics = [#tpu.dimension_semantics<parallel>], iteration_bounds = array<i64: 4>, scalar_prefetch = 0 : i64, scratch_operands = 1 : i64, tpu.core_type = #tpu.core_type<tc>, window_params = [{transform_indices = @transform_0, window_bounds = array<i64: 128, 128>}, {pipeline_mode = #tpu.pipeline_mode<synchronous>, transform_indices = @transform_1, window_bounds = array<i64: 128, 32>}, {pipeline_mode = #tpu.pipeline_mode<synchronous>, transform_indices = @transform_2, window_bounds = array<i64: 1, 32>}, {pipeline_mode = #tpu.pipeline_mode<synchronous>, transform_indices = @transform_3, window_bounds = array<i64: 32, 32>}, {pipeline_mode = #tpu.pipeline_mode<synchronous>, transform_indices = @transform_4, window_bounds = array<i64: 1, 32>}, {pipeline_mode = #tpu.pipeline_mode<synchronous>, transform_indices = @transform_5, window_bounds = array<i64: 256, 128>}, {pipeline_mode = #tpu.pipeline_mode<synchronous>, transform_indices = @transform_6, window_bounds = array<i64: 1, 128>}, {transform_indices = @transform_7, window_bounds = array<i64: 16, 128>}]} {
    %c0 = arith.constant 0 : index
    %c0_0 = arith.constant 0 : index
    %0 = vector.load %arg1[%c0, %c0_0] : memref<128x128xf32, #tpu.memory_space<vmem>>, vector<128x128xf32>
    %c0_1 = arith.constant 0 : index
    %c0_2 = arith.constant 0 : index
    %1 = vector.load %arg2[%c0_1, %c0_2] : memref<128x32xf32, #tpu.memory_space<vmem>>, vector<128x32xf32>
    %cst = arith.constant dense<0.000000e+00> : vector<128x32xf32>
    %2 = tpu.matmul %0, %1, %cst {dimension_numbers = #tpu.dot_dimension_numbers<[1], [0], [0], [1], [0, 0, 1, 1], [], []>} : vector<128x128xf32>, vector<128x32xf32>, vector<128x32xf32> -> vector<128x32xf32>
    %c0_3 = arith.constant 0 : index
    %c0_4 = arith.constant 0 : index
    %3 = vector.load %arg3[%c0_3, %c0_4] : memref<1x32xf32, #tpu.memory_space<vmem>>, vector<1x32xf32>
    %4 = vector.broadcast %3 : vector<1x32xf32> to vector<128x32xf32>
    %5 = arith.addf %2, %4 : vector<128x32xf32>
    %cst_5 = arith.constant 0.000000e+00 : f32
    %6 = vector.broadcast %cst_5 : f32 to vector<128x32xf32>
    %7 = arith.maximumf %5, %6 : vector<128x32xf32>
    %c0_6 = arith.constant 0 : index
    %c0_7 = arith.constant 0 : index
    %8 = vector.load %arg4[%c0_6, %c0_7] : memref<32x32xf32, #tpu.memory_space<vmem>>, vector<32x32xf32>
    %cst_8 = arith.constant dense<0.000000e+00> : vector<128x32xf32>
    %9 = tpu.matmul %7, %8, %cst_8 {dimension_numbers = #tpu.dot_dimension_numbers<[1], [0], [0], [1], [0, 0, 1, 1], [], []>} : vector<128x32xf32>, vector<32x32xf32>, vector<128x32xf32> -> vector<128x32xf32>
    %c0_9 = arith.constant 0 : index
    %c0_10 = arith.constant 0 : index
    %10 = vector.load %arg5[%c0_9, %c0_10] : memref<1x32xf32, #tpu.memory_space<vmem>>, vector<1x32xf32>
    %11 = vector.broadcast %10 : vector<1x32xf32> to vector<128x32xf32>
    %12 = arith.addf %9, %11 : vector<128x32xf32>
    %cst_11 = arith.constant 0.000000e+00 : f32
    %13 = vector.broadcast %cst_11 : f32 to vector<128x32xf32>
    %14 = arith.maximumf %12, %13 : vector<128x32xf32>
    %15 = vector.shape_cast %14 : vector<128x32xf32> to vector<16x8x32xf32>
    %16 = vector.extract_strided_slice %15 {offsets = [0, 0, 0], sizes = [16, 1, 32], strides = [1, 1, 1]} : vector<16x8x32xf32> to vector<16x1x32xf32>
    %17 = vector.shape_cast %16 : vector<16x1x32xf32> to vector<16x32xf32>
    %c0_12 = arith.constant 0 : index
    %c0_13 = arith.constant 0 : index
    %18 = vector.load %arg9[%c0_12, %c0_13] : memref<16x256xf32, #tpu.memory_space<vmem>>, vector<16x32xf32>
    tpu.vector_store %arg9[%c0_12, %c0_13], %17 {strides = array<i32>} : memref<16x256xf32, #tpu.memory_space<vmem>>, vector<16x32xf32>,
    %19 = vector.extract_strided_slice %15 {offsets = [0, 1, 0], sizes = [16, 1, 32], strides = [1, 1, 1]} : vector<16x8x32xf32> to vector<16x1x32xf32>
    %20 = vector.shape_cast %19 : vector<16x1x32xf32> to vector<16x32xf32>
    %c0_14 = arith.constant 0 : index
    %c32 = arith.constant 32 : index
    %21 = vector.load %arg9[%c0_14, %c32] : memref<16x256xf32, #tpu.memory_space<vmem>>, vector<16x32xf32>
    tpu.vector_store %arg9[%c0_14, %c32], %20 {strides = array<i32>} : memref<16x256xf32, #tpu.memory_space<vmem>>, vector<16x32xf32>,
    %22 = vector.extract_strided_slice %15 {offsets = [0, 2, 0], sizes = [16, 1, 32], strides = [1, 1, 1]} : vector<16x8x32xf32> to vector<16x1x32xf32>
    %23 = vector.shape_cast %22 : vector<16x1x32xf32> to vector<16x32xf32>
    %c0_15 = arith.constant 0 : index
    %c64 = arith.constant 64 : index
    %24 = vector.load %arg9[%c0_15, %c64] : memref<16x256xf32, #tpu.memory_space<vmem>>, vector<16x32xf32>
    tpu.vector_store %arg9[%c0_15, %c64], %23 {strides = array<i32>} : memref<16x256xf32, #tpu.memory_space<vmem>>, vector<16x32xf32>,
    %25 = vector.extract_strided_slice %15 {offsets = [0, 3, 0], sizes = [16, 1, 32], strides = [1, 1, 1]} : vector<16x8x32xf32> to vector<16x1x32xf32>
    %26 = vector.shape_cast %25 : vector<16x1x32xf32> to vector<16x32xf32>
    %c0_16 = arith.constant 0 : index
    %c96 = arith.constant 96 : index
    %27 = vector.load %arg9[%c0_16, %c96] : memref<16x256xf32, #tpu.memory_space<vmem>>, vector<16x32xf32>
    tpu.vector_store %arg9[%c0_16, %c96], %26 {strides = array<i32>} : memref<16x256xf32, #tpu.memory_space<vmem>>, vector<16x32xf32>,
    %28 = vector.extract_strided_slice %15 {offsets = [0, 4, 0], sizes = [16, 1, 32], strides = [1, 1, 1]} : vector<16x8x32xf32> to vector<16x1x32xf32>
    %29 = vector.shape_cast %28 : vector<16x1x32xf32> to vector<16x32xf32>
    %c0_17 = arith.constant 0 : index
    %c128 = arith.constant 128 : index
    %30 = vector.load %arg9[%c0_17, %c128] : memref<16x256xf32, #tpu.memory_space<vmem>>, vector<16x32xf32>
    tpu.vector_store %arg9[%c0_17, %c128], %29 {strides = array<i32>} : memref<16x256xf32, #tpu.memory_space<vmem>>, vector<16x32xf32>,
    %31 = vector.extract_strided_slice %15 {offsets = [0, 5, 0], sizes = [16, 1, 32], strides = [1, 1, 1]} : vector<16x8x32xf32> to vector<16x1x32xf32>
    %32 = vector.shape_cast %31 : vector<16x1x32xf32> to vector<16x32xf32>
    %c0_18 = arith.constant 0 : index
    %c160 = arith.constant 160 : index
    %33 = vector.load %arg9[%c0_18, %c160] : memref<16x256xf32, #tpu.memory_space<vmem>>, vector<16x32xf32>
    tpu.vector_store %arg9[%c0_18, %c160], %32 {strides = array<i32>} : memref<16x256xf32, #tpu.memory_space<vmem>>, vector<16x32xf32>,
    %34 = vector.extract_strided_slice %15 {offsets = [0, 6, 0], sizes = [16, 1, 32], strides = [1, 1, 1]} : vector<16x8x32xf32> to vector<16x1x32xf32>
    %35 = vector.shape_cast %34 : vector<16x1x32xf32> to vector<16x32xf32>
    %c0_19 = arith.constant 0 : index
    %c192 = arith.constant 192 : index
    %36 = vector.load %arg9[%c0_19, %c192] : memref<16x256xf32, #tpu.memory_space<vmem>>, vector<16x32xf32>
    tpu.vector_store %arg9[%c0_19, %c192], %35 {strides = array<i32>} : memref<16x256xf32, #tpu.memory_space<vmem>>, vector<16x32xf32>,
    %37 = vector.extract_strided_slice %15 {offsets = [0, 7, 0], sizes = [16, 1, 32], strides = [1, 1, 1]} : vector<16x8x32xf32> to vector<16x1x32xf32>
    %38 = vector.shape_cast %37 : vector<16x1x32xf32> to vector<16x32xf32>
    %c0_20 = arith.constant 0 : index
    %c224 = arith.constant 224 : index
    %39 = vector.load %arg9[%c0_20, %c224] : memref<16x256xf32, #tpu.memory_space<vmem>>, vector<16x32xf32>
    tpu.vector_store %arg9[%c0_20, %c224], %38 {strides = array<i32>} : memref<16x256xf32, #tpu.memory_space<vmem>>, vector<16x32xf32>,
    %c0_21 = arith.constant 0 : index
    %c0_22 = arith.constant 0 : index
    %40 = vector.load %arg9[%c0_21, %c0_22] : memref<16x256xf32, #tpu.memory_space<vmem>>, vector<16x256xf32>
    %c0_23 = arith.constant 0 : index
    %c0_24 = arith.constant 0 : index
    %41 = vector.load %arg6[%c0_23, %c0_24] : memref<256x128xf32, #tpu.memory_space<vmem>>, vector<256x128xf32>
    %cst_25 = arith.constant dense<0.000000e+00> : vector<16x128xf32>
    %42 = tpu.matmul %40, %41, %cst_25 {dimension_numbers = #tpu.dot_dimension_numbers<[1], [0], [0], [1], [0, 0, 1, 1], [], []>} : vector<16x256xf32>, vector<256x128xf32>, vector<16x128xf32> -> vector<16x128xf32>
    %c0_26 = arith.constant 0 : index
    %c0_27 = arith.constant 0 : index
    %43 = vector.load %arg7[%c0_26, %c0_27] : memref<1x128xf32, #tpu.memory_space<vmem>>, vector<1x128xf32>
    %44 = vector.broadcast %43 : vector<1x128xf32> to vector<16x128xf32>
    %45 = arith.addf %42, %44 : vector<16x128xf32>
    %cst_28 = arith.constant dense<0xFF800000> : vector<16xf32>
    %46 = vector.multi_reduction <maximumf>, %45, %cst_28 [1] : vector<16x128xf32> to vector<16xf32>
    %47 = vector.shape_cast %46 : vector<16xf32> to vector<16x1xf32>
    %48 = vector.broadcast %47 : vector<16x1xf32> to vector<16x128xf32>
    %49 = arith.subf %45, %48 : vector<16x128xf32>
    %50 = math.exp %49 : vector<16x128xf32>
    %cst_29 = arith.constant dense<0.000000e+00> : vector<16xf32>
    %51 = vector.multi_reduction <add>, %50, %cst_29 [1] : vector<16x128xf32> to vector<16xf32>
    %52 = vector.shape_cast %51 : vector<16xf32> to vector<16x1xf32>
    %53 = math.log %52 : vector<16x1xf32>
    %54 = vector.broadcast %53 : vector<16x1xf32> to vector<16x128xf32>
    %55 = arith.subf %49, %54 : vector<16x128xf32>
    %c0_30 = arith.constant 0 : index
    %c0_31 = arith.constant 0 : index
    %56 = vector.load %arg8[%c0_30, %c0_31] : memref<16x128xf32, #tpu.memory_space<vmem>>, vector<16x128xf32>
    tpu.vector_store %arg8[%c0_30, %c0_31], %55 {strides = array<i32>} : memref<16x128xf32, #tpu.memory_space<vmem>>, vector<16x128xf32>,
    return
  }
  func.func @transform_0(%arg0: i32) -> (i32, i32) {
    %c0_i32 = arith.constant 0 : i32
    %c0_i32_0 = arith.constant 0 : i32
    return %arg0, %c0_i32 : i32, i32
  }
  func.func @transform_1(%arg0: i32) -> (i32, i32) {
    %c0_i32 = arith.constant 0 : i32
    %c0_i32_0 = arith.constant 0 : i32
    %c0_i32_1 = arith.constant 0 : i32
    return %c0_i32, %c0_i32_0 : i32, i32
  }
  func.func @transform_2(%arg0: i32) -> (i32, i32) {
    %c0_i32 = arith.constant 0 : i32
    %c0_i32_0 = arith.constant 0 : i32
    %c0_i32_1 = arith.constant 0 : i32
    return %c0_i32, %c0_i32_0 : i32, i32
  }
  func.func @transform_3(%arg0: i32) -> (i32, i32) {
    %c0_i32 = arith.constant 0 : i32
    %c0_i32_0 = arith.constant 0 : i32
    %c0_i32_1 = arith.constant 0 : i32
    return %c0_i32, %c0_i32_0 : i32, i32
  }
  func.func @transform_4(%arg0: i32) -> (i32, i32) {
    %c0_i32 = arith.constant 0 : i32
    %c0_i32_0 = arith.constant 0 : i32
    %c0_i32_1 = arith.constant 0 : i32
    return %c0_i32, %c0_i32_0 : i32, i32
  }
  func.func @transform_5(%arg0: i32) -> (i32, i32) {
    %c0_i32 = arith.constant 0 : i32
    %c0_i32_0 = arith.constant 0 : i32
    %c0_i32_1 = arith.constant 0 : i32
    return %c0_i32, %c0_i32_0 : i32, i32
  }
  func.func @transform_6(%arg0: i32) -> (i32, i32) {
    %c0_i32 = arith.constant 0 : i32
    %c0_i32_0 = arith.constant 0 : i32
    %c0_i32_1 = arith.constant 0 : i32
    return %c0_i32, %c0_i32_0 : i32, i32
  }
  func.func @transform_7(%arg0: i32) -> (i32, i32) {
    %c0_i32 = arith.constant 0 : i32
    %c0_i32_0 = arith.constant 0 : i32
    return %arg0, %c0_i32 : i32, i32
  }
}

</mosaic_0001>

<llo_original>
// kernel: batch_pscn_forward.1
$region0: #{batch_pscn_forward.1}
  #allocation0 [shape = 'u32[]', space=smem, size = 0x4, offset = 0x4, fixed_abs, tag = 'smem constant byte address 0x4 - core index']
  #allocation1 [shape = 'u32[144,128]{1,0:T(1,128)}', space=vmem, size = 0x12000, scoped, tag = 'internal scratch']
  #allocation2 [shape = 'f32[16,256]{1,0:T(8,128)}', space=vmem, size = 0x4000, scoped, tag = 'scratch operand']
  %s0 = inlined_call_operand.vmem [shape: f32[512,128], index: 0, kind: input, shape index: {}]
  %s1 = inlined_call_operand.vmem [shape: f32[128,32], index: 1, kind: input, shape index: {}]
  %s2 = inlined_call_operand.vmem [shape: f32[1,32], index: 2, kind: input, shape index: {}]
  %s3 = inlined_call_operand.vmem [shape: f32[32,32], index: 3, kind: input, shape index: {}]
  %s4 = inlined_call_operand.vmem [shape: f32[1,32], index: 4, kind: input, shape index: {}]
  %s5 = inlined_call_operand.vmem [shape: f32[256,128], index: 5, kind: input, shape index: {}]
  %s6 = inlined_call_operand.vmem [shape: f32[1,128], index: 6, kind: input, shape index: {}]
  %s7 = inlined_call_operand.vmem [shape: f32[64,128], index: 7, kind: output, shape index: {}]
  %s8 = sld [smem:[#allocation0]]
  $region61: #{batch_pscn_forward.1} parent=0
    _
  %s10 = ssub.s32 1, %s8
  %s11 = scalar_select 0, %s10, %s8
  loop: start=0, step=1, limit=6
  $region2: #{batch_pscn_forward.1} parent=0 // loop_pre_header
    _
  $region3: #{batch_pscn_forward.1} parent=0 // loop_header
    %s13 = sphi 0, %s17
    %p14 = scmp.ge.s32.totalorder %s13, 6
    %s23 = sphi 0, %s25
    %s26 = sphi 0, %s23
    %s27 = sphi 0, %s26
    %s43 = sphi 0, %s27
    %s47 = sphi 0, %s47
    %s49 = sphi 0, %s47
    %s50 = sphi 0, %s49
    %s64 = sphi 0, %s50
    %s68 = sphi 0, %s68
    %s70 = sphi 0, %s68
    %s71 = sphi 0, %s70
    %s85 = sphi 0, %s71
    %s89 = sphi 0, %s89
    %s91 = sphi 0, %s89
    %s92 = sphi 0, %s91
    %s106 = sphi 0, %s92
    %s110 = sphi 0, %s110
    %s112 = sphi 0, %s110
    %s113 = sphi 0, %s112
    %s127 = sphi 0, %s113
    %s131 = sphi 0, %s131
    %s133 = sphi 0, %s131
    %s134 = sphi 0, %s133
    %s148 = sphi 0, %s134
    %s152 = sphi 0, %s152
    %s154 = sphi 0, %s152
    %s155 = sphi 0, %s154
    %s169 = sphi 0, %s155
    %s175 = sphi 0, %s177
    %s178 = sphi 0, %s175
    %s179 = sphi 0, %s178
    %s195 = sphi 0, %s179
  $region4: #{batch_pscn_forward.1} parent=0 // loop_header_branch
    %16 = sbr.rel (%p14) target = $region8
  $region5: #{batch_pscn_forward.1} parent=0 // loop_body
    %s18 = ssub.s32 %s13, 1
    %s19 = ssub.s32 %s13, 2
    %s20 = sadd.s32 %s13, 1
    %s21 = ssub.s32 %s13, %s20
    %p22 = scmp.eq.s32.totalorder %s21, 0
    %s24 = sadd.s32 %s23, 1
    %s25 = scalar_select %p22, %s23, %s24
    %p28 = pneg %p22
    %p29 = scmp.eq.s32.totalorder %s13, 3
    %p30 = por %p28, %p29
    %p31 = scmp.ne.s32.totalorder %s23, %s26
    %p32 = scmp.eq.s32.totalorder %s13, 0
    %p33 = por %p31, %p32
    %p34 = scmp.ne.s32.totalorder %s23, %s26
    %p35 = scmp.eq.s32.totalorder %s18, 3
    %p36 = por %p34, %p35
    %p37 = scmp.ne.s32.totalorder %s26, %s27
    %p38 = scmp.eq.s32.totalorder %s18, 0
    %p39 = por %p37, %p38
    %p40 = scmp.ne.s32.totalorder %s26, %s27
    %p41 = scmp.eq.s32.totalorder %s19, 3
    %p42 = por %p40, %p41
    %p44 = scmp.ne.s32.totalorder %s27, %s43
    %p45 = scmp.eq.s32.totalorder %s19, 0
    %p46 = por %p44, %p45
    %s48 = sadd.s32 %s47, 1
    %p51 = scmp.eq.s32.totalorder %s13, 3
    %p52 = scmp.ne.s32.totalorder %s47, %s49
    %p53 = scmp.eq.s32.totalorder %s13, 0
    %p54 = por %p52, %p53
    %p55 = scmp.ne.s32.totalorder %s47, %s49
    %p56 = scmp.eq.s32.totalorder %s18, 3
    %p57 = por %p55, %p56
    %p58 = scmp.ne.s32.totalorder %s49, %s50
    %p59 = scmp.eq.s32.totalorder %s18, 0
    %p60 = por %p58, %p59
    %p61 = scmp.ne.s32.totalorder %s49, %s50
    %p62 = scmp.eq.s32.totalorder %s19, 3
    %p63 = por %p61, %p62
    %p65 = scmp.ne.s32.totalorder %s50, %s64
    %p66 = scmp.eq.s32.totalorder %s19, 0
    %p67 = por %p65, %p66
    %s69 = sadd.s32 %s68, 1
    %p72 = scmp.eq.s32.totalorder %s13, 3
    %p73 = scmp.ne.s32.totalorder %s68, %s70
    %p74 = scmp.eq.s32.totalorder %s13, 0
    %p75 = por %p73, %p74
    %p76 = scmp.ne.s32.totalorder %s68, %s70
    %p77 = scmp.eq.s32.totalorder %s18, 3
    %p78 = por %p76, %p77
    %p79 = scmp.ne.s32.totalorder %s70, %s71
    %p80 = scmp.eq.s32.totalorder %s18, 0
    %p81 = por %p79, %p80
    %p82 = scmp.ne.s32.totalorder %s70, %s71
    %p83 = scmp.eq.s32.totalorder %s19, 3
    %p84 = por %p82, %p83
    %p86 = scmp.ne.s32.totalorder %s71, %s85
    %p87 = scmp.eq.s32.totalorder %s19, 0
    %p88 = por %p86, %p87
    %s90 = sadd.s32 %s89, 1
    %p93 = scmp.eq.s32.totalorder %s13, 3
    %p94 = scmp.ne.s32.totalorder %s89, %s91
    %p95 = scmp.eq.s32.totalorder %s13, 0
    %p96 = por %p94, %p95
    %p97 = scmp.ne.s32.totalorder %s89, %s91
    %p98 = scmp.eq.s32.totalorder %s18, 3
    %p99 = por %p97, %p98
    %p100 = scmp.ne.s32.totalorder %s91, %s92
    %p101 = scmp.eq.s32.totalorder %s18, 0
    %p102 = por %p100, %p101
    %p103 = scmp.ne.s32.totalorder %s91, %s92
    %p104 = scmp.eq.s32.totalorder %s19, 3
    %p105 = por %p103, %p104
    %p107 = scmp.ne.s32.totalorder %s92, %s106
    %p108 = scmp.eq.s32.totalorder %s19, 0
    %p109 = por %p107, %p108
    %s111 = sadd.s32 %s110, 1
    %p114 = scmp.eq.s32.totalorder %s13, 3
    %p115 = scmp.ne.s32.totalorder %s110, %s112
    %p116 = scmp.eq.s32.totalorder %s13, 0
    %p117 = por %p115, %p116
    %p118 = scmp.ne.s32.totalorder %s110, %s112
    %p119 = scmp.eq.s32.totalorder %s18, 3
    %p120 = por %p118, %p119
    %p121 = scmp.ne.s32.totalorder %s112, %s113
    %p122 = scmp.eq.s32.totalorder %s18, 0
    %p123 = por %p121, %p122
    %p124 = scmp.ne.s32.totalorder %s112, %s113
    %p125 = scmp.eq.s32.totalorder %s19, 3
    %p126 = por %p124, %p125
    %p128 = scmp.ne.s32.totalorder %s113, %s127
    %p129 = scmp.eq.s32.totalorder %s19, 0
    %p130 = por %p128, %p129
    %s132 = sadd.s32 %s131, 1
    %p135 = scmp.eq.s32.totalorder %s13, 3
    %p136 = scmp.ne.s32.totalorder %s131, %s133
    %p137 = scmp.eq.s32.totalorder %s13, 0
    %p138 = por %p136, %p137
    %p139 = scmp.ne.s32.totalorder %s131, %s133
    %p140 = scmp.eq.s32.totalorder %s18, 3
    %p141 = por %p139, %p140
    %p142 = scmp.ne.s32.totalorder %s133, %s134
    %p143 = scmp.eq.s32.totalorder %s18, 0
    %p144 = por %p142, %p143
    %p145 = scmp.ne.s32.totalorder %s133, %s134
    %p146 = scmp.eq.s32.totalorder %s19, 3
    %p147 = por %p145, %p146
    %p149 = scmp.ne.s32.totalorder %s134, %s148
    %p150 = scmp.eq.s32.totalorder %s19, 0
    %p151 = por %p149, %p150
    %s153 = sadd.s32 %s152, 1
    %p156 = scmp.eq.s32.totalorder %s13, 3
    %p157 = scmp.ne.s32.totalorder %s152, %s154
    %p158 = scmp.eq.s32.totalorder %s13, 0
    %p159 = por %p157, %p158
    %p160 = scmp.ne.s32.totalorder %s152, %s154
    %p161 = scmp.eq.s32.totalorder %s18, 3
    %p162 = por %p160, %p161
    %p163 = scmp.ne.s32.totalorder %s154, %s155
    %p164 = scmp.eq.s32.totalorder %s18, 0
    %p165 = por %p163, %p164
    %p166 = scmp.ne.s32.totalorder %s154, %s155
    %p167 = scmp.eq.s32.totalorder %s19, 3
    %p168 = por %p166, %p167
    %p170 = scmp.ne.s32.totalorder %s155, %s169
    %p171 = scmp.eq.s32.totalorder %s19, 0
    %p172 = por %p170, %p171
    %s173 = ssub.s32 %s13, %s20
    %p174 = scmp.eq.s32.totalorder %s173, 0
    %s176 = sadd.s32 %s175, 1
    %s177 = scalar_select %p174, %s175, %s176
    %p180 = pneg %p174
    %p181 = scmp.eq.s32.totalorder %s13, 3
    %p182 = por %p180, %p181
    %p183 = scmp.ne.s32.totalorder %s175, %s178
    %p184 = scmp.eq.s32.totalorder %s13, 0
    %p185 = por %p183, %p184
    %p186 = scmp.ne.s32.totalorder %s175, %s178
    %p187 = scmp.eq.s32.totalorder %s18, 3
    %p188 = por %p186, %p187
    %p189 = scmp.ne.s32.totalorder %s178, %s179
    %p190 = scmp.eq.s32.totalorder %s18, 0
    %p191 = por %p189, %p190
    %p192 = scmp.ne.s32.totalorder %s178, %s179
    %p193 = scmp.eq.s32.totalorder %s19, 3
    %p194 = por %p192, %p193
    %p196 = scmp.ne.s32.totalorder %s179, %s195
    %p197 = scmp.eq.s32.totalorder %s19, 0
    %p198 = por %p196, %p197
    %p199 = scmp.le.s32.totalorder 1, %s13
    %p200 = scmp.lt.s32.totalorder %s13, 5
    %p201 = pnand %p199, %p200
    %p202 = pneg %p201
    // Predicated region
    $region9: #{batch_pscn_forward.1} parent=5 // pred_check
      _
    $region10: #{batch_pscn_forward.1} parent=5 // pred_check_branch
      %204 = sbr.rel (%p201) target = $region12
    $region11: #{batch_pscn_forward.1} parent=5 // pred_region
      %s205 = ssub.s32 %s13, 1
      // Predicated region
      $region13: #{batch_pscn_forward.1} parent=11 // pred_check
        %p206 = pneg %p60
      $region14: #{batch_pscn_forward.1} parent=11 // pred_check_branch
        %208 = sbr.rel (%p206) target = $region16
      $region15: #{batch_pscn_forward.1} parent=11 // pred_region
        _
      $region16: #{batch_pscn_forward.1} parent=11 // pred_fallthru
        _
      // Predicated region
      $region17: #{batch_pscn_forward.1} parent=11 // pred_check
        %p209 = pneg %p81
      $region18: #{batch_pscn_forward.1} parent=11 // pred_check_branch
        %211 = sbr.rel (%p209) target = $region20
      $region19: #{batch_pscn_forward.1} parent=11 // pred_region
        _
      $region20: #{batch_pscn_forward.1} parent=11 // pred_fallthru
        _
      // Predicated region
      $region21: #{batch_pscn_forward.1} parent=11 // pred_check
        %p212 = pneg %p102
      $region22: #{batch_pscn_forward.1} parent=11 // pred_check_branch
        %214 = sbr.rel (%p212) target = $region24
      $region23: #{batch_pscn_forward.1} parent=11 // pred_region
        _
      $region24: #{batch_pscn_forward.1} parent=11 // pred_fallthru
        _
      // Predicated region
      $region25: #{batch_pscn_forward.1} parent=11 // pred_check
        %p215 = pneg %p123
      $region26: #{batch_pscn_forward.1} parent=11 // pred_check_branch
        %217 = sbr.rel (%p215) target = $region28
      $region27: #{batch_pscn_forward.1} parent=11 // pred_region
        _
      $region28: #{batch_pscn_forward.1} parent=11 // pred_fallthru
        _
      // Predicated region
      $region29: #{batch_pscn_forward.1} parent=11 // pred_check
        %p218 = pneg %p144
      $region30: #{batch_pscn_forward.1} parent=11 // pred_check_branch
        %220 = sbr.rel (%p218) target = $region32
      $region31: #{batch_pscn_forward.1} parent=11 // pred_region
        _
      $region32: #{batch_pscn_forward.1} parent=11 // pred_fallthru
        _
      // Predicated region
      $region33: #{batch_pscn_forward.1} parent=11 // pred_check
        %p221 = pneg %p165
      $region34: #{batch_pscn_forward.1} parent=11 // pred_check_branch
        %223 = sbr.rel (%p221) target = $region36
      $region35: #{batch_pscn_forward.1} parent=11 // pred_region
        _
      $region36: #{batch_pscn_forward.1} parent=11 // pred_fallthru
        _
    $region12: #{batch_pscn_forward.1} parent=5 // pred_fallthru
      _
    %p224 = scmp.lt.s32.totalorder %s13, 4
    // Predicated region
    $region37: #{batch_pscn_forward.1} parent=5 // pred_check
      %p225 = pneg %p224
    $region38: #{batch_pscn_forward.1} parent=5 // pred_check_branch
      %227 = sbr.rel (%p225) target = $region40
    $region39: #{batch_pscn_forward.1} parent=5 // pred_region
      // Predicated region
      $region41: #{batch_pscn_forward.1} parent=39 // pred_check
        %p228 = pneg %p33
      $region42: #{batch_pscn_forward.1} parent=39 // pred_check_branch
        %230 = sbr.rel (%p228) target = $region44
      $region43: #{batch_pscn_forward.1} parent=39 // pred_region
        %s231 = smul.u32 16, %s13
        %p232 = scmp.lt.s32.totalorder %s231, 63
        %s233 = scalar_select %p232, %s231, 63
        %s234 = smul.addr %s233, 8
        %s235 = scalar_lea.vmem %s0, %s234
        %s236 = smul.u32 16, %s13
      $region44: #{batch_pscn_forward.1} parent=39 // pred_fallthru
        _
    $region40: #{batch_pscn_forward.1} parent=5 // pred_fallthru
      _
    %p237 = scmp.le.s32.totalorder 1, %s13
    %p238 = scmp.lt.s32.totalorder %s13, 5
    %p239 = pnand %p237, %p238
    %p240 = pneg %p239
    // Predicated region
    $region45: #{batch_pscn_forward.1} parent=5 // pred_check
      _
    $region46: #{batch_pscn_forward.1} parent=5 // pred_check_branch
      %242 = sbr.rel (%p239) target = $region48
    $region47: #{batch_pscn_forward.1} parent=5 // pred_region
      %s243 = ssub.s32 %s13, 1
      %s244 = smul.u32 16, %s18
      %p245 = scmp.lt.s32.totalorder %s244, 63
      %s246 = scalar_select %p245, %s244, 63
      %s247 = smul.addr %s246, 8
      %s248 = scalar_lea.vmem %s0, %s247
      %p249 = pneg %p39
      %p250 = pneg %p36
      %p251 = pneg %p60
      %p252 = pneg %p57
      %p253 = pneg %p81
      %p254 = pneg %p78
      %p255 = pneg %p102
      %p256 = pneg %p99
      %p257 = pneg %p123
      %p258 = pneg %p120
      %p259 = pneg %p144
      %p260 = pneg %p141
      %p261 = pneg %p165
      %p262 = pneg %p162
      %p263 = pneg %p191
      %p264 = pneg %p188
      %s265 = smul.u32 2, %s18
      %p266 = scmp.lt.s32.totalorder %s265, 7
      %s267 = scalar_select %p266, %s265, 7
      %s268 = smul.addr %s267, 8
      %s269 = scalar_lea.vmem %s7, %s268
      %s270 = smul.u32 16, %s18
      %p271 = scmp.lt.s32.totalorder %s270, 63
      %s272 = scalar_select %p271, %s270, 63
      %s273 = smul.addr %s272, 8
      %s274 = scalar_lea.vmem %s0, %s273
      %s275 = smul.u32 16, %s18
      %s276 = smul.u32 2, %s18
      %p277 = scmp.lt.s32.totalorder %s276, 7
      %s278 = scalar_select %p277, %s276, 7
      %s279 = smul.addr %s278, 8
      %s280 = scalar_lea.vmem %s7, %s279
      %s281 = smul.u32 2, %s18
      %v282 = vld [vmem:[%s274] sm:$0xff]
      %v283 = vld [vmem:[%s274 + $0x8] sm:$0xff]
      %v284 = vld [vmem:[%s274 + $0x10] sm:$0xff]
      %v285 = vld [vmem:[%s274 + $0x18] sm:$0xff]
      %v286 = vld [vmem:[%s274 + $0x20] sm:$0xff]
      %v287 = vld [vmem:[%s274 + $0x28] sm:$0xff]
      %v288 = vld [vmem:[%s274 + $0x30] sm:$0xff]
      %v289 = vld [vmem:[%s274 + $0x38] sm:$0xff]
      %v290 = vld [vmem:[%s274 + $0x40] sm:$0xff]
      %v291 = vld [vmem:[%s274 + $0x48] sm:$0xff]
      %v292 = vld [vmem:[%s274 + $0x50] sm:$0xff]
      %v293 = vld [vmem:[%s274 + $0x58] sm:$0xff]
      %v294 = vld [vmem:[%s274 + $0x60] sm:$0xff]
      %v295 = vld [vmem:[%s274 + $0x68] sm:$0xff]
      %v296 = vld [vmem:[%s274 + $0x70] sm:$0xff]
      %v297 = vld [vmem:[%s274 + $0x78] sm:$0xff]
      %v298 = vld [vmem:[%s1] sm:$0xff]
      %v299 = vld [vmem:[%s1 + $0x8] sm:$0xff]
      %v300 = vld [vmem:[%s1 + $0x10] sm:$0xff]
      %v301 = vld [vmem:[%s1 + $0x18] sm:$0xff]
      %v302 = vld [vmem:[%s1 + $0x20] sm:$0xff]
      %v303 = vld [vmem:[%s1 + $0x28] sm:$0xff]
      %v304 = vld [vmem:[%s1 + $0x30] sm:$0xff]
      %v305 = vld [vmem:[%s1 + $0x38] sm:$0xff]
      %v306 = vld [vmem:[%s1 + $0x40] sm:$0xff]
      %v307 = vld [vmem:[%s1 + $0x48] sm:$0xff]
      %v308 = vld [vmem:[%s1 + $0x50] sm:$0xff]
      %v309 = vld [vmem:[%s1 + $0x58] sm:$0xff]
      %v310 = vld [vmem:[%s1 + $0x60] sm:$0xff]
      %v311 = vld [vmem:[%s1 + $0x68] sm:$0xff]
      %v312 = vld [vmem:[%s1 + $0x70] sm:$0xff]
      %v313 = vld [vmem:[%s1 + $0x78] sm:$0xff]
      %v314 = vld [vmem:[%s2] sm:$0x1]
      %v316 = vlaneseq
      %v317 = vshrl.u32 %v316, 7
      %v318 = vsub.s32 0, %v317
      %v319 = vrot.slane %v314, %v318
      %321 = vmatprep.subr.mxu0 0.0
      %322 = vmatpush1.msra.mxu0 %v313
      %323 = vmatprep.subr.mxu0 0.0
      %324 = vmatpush1.msra.mxu0 %v312
      %325 = vmatprep.subr.mxu0 0.0
      %326 = vmatpush1.msra.mxu0 %v311
      %327 = vmatprep.subr.mxu0 0.0
      %328 = vmatpush1.msra.mxu0 %v310
      %329 = vmatprep.subr.mxu0 0.0
      %330 = vmatpush1.msra.mxu0 %v309
      %331 = vmatprep.subr.mxu0 0.0
      %332 = vmatpush1.msra.mxu0 %v308
      %333 = vmatprep.subr.mxu0 0.0
      %334 = vmatpush1.msra.mxu0 %v307
      %335 = vmatprep.subr.mxu0 0.0
      %336 = vmatpush1.msra.mxu0 %v306
      %337 = vmatprep.subr.mxu0 0.0
      %338 = vmatpush1.msra.mxu0 %v305
      %339 = vmatprep.subr.mxu0 0.0
      %340 = vmatpush1.msra.mxu0 %v304
      %341 = vmatprep.subr.mxu0 0.0
      %342 = vmatpush1.msra.mxu0 %v303
      %343 = vmatprep.subr.mxu0 0.0
      %344 = vmatpush1.msra.mxu0 %v302
      %345 = vmatprep.subr.mxu0 0.0
      %346 = vmatpush1.msra.mxu0 %v301
      %347 = vmatprep.subr.mxu0 0.0
      %348 = vmatpush1.msra.mxu0 %v300
      %349 = vmatprep.subr.mxu0 0.0
      %350 = vmatpush1.msra.mxu0 %v299
      %351 = vmatprep.subr.mxu0 0.0
      %352 = vmatpush1.msra.mxu0 %v298
      %353 = vmatprep.subr.mxu0 0.0
      %354 = vmatpush2.msra.mxu0 0.0
      %355 = vmatprep.subr.mxu0 0.0
      %356 = vmatpush2.msra.mxu0 0.0
      %357 = vmatprep.subr.mxu0 0.0
      %358 = vmatpush2.msra.mxu0 0.0
      %359 = vmatprep.subr.mxu0 0.0
      %360 = vmatpush2.msra.mxu0 0.0
      %361 = vmatprep.subr.mxu0 0.0
      %362 = vmatpush2.msra.mxu0 0.0
      %363 = vmatprep.subr.mxu0 0.0
      %364 = vmatpush2.msra.mxu0 0.0
      %365 = vmatprep.subr.mxu0 0.0
      %366 = vmatpush2.msra.mxu0 0.0
      %367 = vmatprep.subr.mxu0 0.0
      %368 = vmatpush2.msra.mxu0 0.0
      %369 = vmatprep.subr.mxu0 0.0
      %370 = vmatpush2.msra.mxu0 0.0
      %371 = vmatprep.subr.mxu0 0.0
      %372 = vmatpush2.msra.mxu0 0.0
      %373 = vmatprep.subr.mxu0 0.0
      %374 = vmatpush2.msra.mxu0 0.0
      %375 = vmatprep.subr.mxu0 0.0
      %376 = vmatpush2.msra.mxu0 0.0
      %377 = vmatprep.subr.mxu0 0.0
      %378 = vmatpush2.msra.mxu0 0.0
      %379 = vmatprep.subr.mxu0 0.0
      %380 = vmatpush2.msra.mxu0 0.0
      %381 = vmatprep.subr.mxu0 0.0
      %382 = vmatpush2.msra.mxu0 0.0
      %383 = vmatprep.subr.mxu0 0.0
      %384 = vmatpush2.msra.mxu0 0.0
      %385 = vmatprep.mubr.f32.mxu0 0.0
      %386 = vmatmul.mubr.f32.gmra.mxu0 %v282
      %v387 = vpop.f32.mrf.mxu0
      %v388 = vadd.f32 %v319, %v387
      %v389 = vpop.f32.mrf.mxu0
      %390 = vmatprep.mubr.f32.mxu0 0.0
      %391 = vmatmul.mubr.f32.gmra.mxu0 %v283
      %v392 = vpop.f32.mrf.mxu0
      %v393 = vadd.f32 %v319, %v392
      %v394 = vpop.f32.mrf.mxu0
      %395 = vmatprep.mubr.f32.mxu0 0.0
      %396 = vmatmul.mubr.f32.gmra.mxu0 %v284
      %v397 = vpop.f32.mrf.mxu0
      %v398 = vadd.f32 %v319, %v397
      %v399 = vpop.f32.mrf.mxu0
      %400 = vmatprep.mubr.f32.mxu0 0.0
      %401 = vmatmul.mubr.f32.gmra.mxu0 %v285
      %v402 = vpop.f32.mrf.mxu0
      %v403 = vadd.f32 %v319, %v402
      %v404 = vpop.f32.mrf.mxu0
      %405 = vmatprep.mubr.f32.mxu0 0.0
      %406 = vmatmul.mubr.f32.gmra.mxu0 %v286
      %v407 = vpop.f32.mrf.mxu0
      %v408 = vadd.f32 %v319, %v407
      %v409 = vpop.f32.mrf.mxu0
      %410 = vmatprep.mubr.f32.mxu0 0.0
      %411 = vmatmul.mubr.f32.gmra.mxu0 %v287
      %v412 = vpop.f32.mrf.mxu0
      %v413 = vadd.f32 %v319, %v412
      %v414 = vpop.f32.mrf.mxu0
      %415 = vmatprep.mubr.f32.mxu0 0.0
      %416 = vmatmul.mubr.f32.gmra.mxu0 %v288
      %v417 = vpop.f32.mrf.mxu0
      %v418 = vadd.f32 %v319, %v417
      %v419 = vpop.f32.mrf.mxu0
      %420 = vmatprep.mubr.f32.mxu0 0.0
      %421 = vmatmul.mubr.f32.gmra.mxu0 %v289
      %v422 = vpop.f32.mrf.mxu0
      %v423 = vadd.f32 %v319, %v422
      %v424 = vpop.f32.mrf.mxu0
      %425 = vmatprep.mubr.f32.mxu0 0.0
      %426 = vmatmul.mubr.f32.gmra.mxu0 %v290
      %v427 = vpop.f32.mrf.mxu0
      %v428 = vadd.f32 %v319, %v427
      %v429 = vpop.f32.mrf.mxu0
      %430 = vmatprep.mubr.f32.mxu0 0.0
      %431 = vmatmul.mubr.f32.gmra.mxu0 %v291
      %v432 = vpop.f32.mrf.mxu0
      %v433 = vadd.f32 %v319, %v432
      %v434 = vpop.f32.mrf.mxu0
      %435 = vmatprep.mubr.f32.mxu0 0.0
      %436 = vmatmul.mubr.f32.gmra.mxu0 %v292
      %v437 = vpop.f32.mrf.mxu0
      %v438 = vadd.f32 %v319, %v437
      %v439 = vpop.f32.mrf.mxu0
      %440 = vmatprep.mubr.f32.mxu0 0.0
      %441 = vmatmul.mubr.f32.gmra.mxu0 %v293
      %v442 = vpop.f32.mrf.mxu0
      %v443 = vadd.f32 %v319, %v442
      %v444 = vpop.f32.mrf.mxu0
      %445 = vmatprep.mubr.f32.mxu0 0.0
      %446 = vmatmul.mubr.f32.gmra.mxu0 %v294
      %v447 = vpop.f32.mrf.mxu0
      %v448 = vadd.f32 %v319, %v447
      %v449 = vpop.f32.mrf.mxu0
      %450 = vmatprep.mubr.f32.mxu0 0.0
      %451 = vmatmul.mubr.f32.gmra.mxu0 %v295
      %v452 = vpop.f32.mrf.mxu0
      %v453 = vadd.f32 %v319, %v452
      %v454 = vpop.f32.mrf.mxu0
      %455 = vmatprep.mubr.f32.mxu0 0.0
      %456 = vmatmul.mubr.f32.gmra.mxu0 %v296
      %v457 = vpop.f32.mrf.mxu0
      %v458 = vadd.f32 %v319, %v457
      %v459 = vpop.f32.mrf.mxu0
      %460 = vmatprep.mubr.f32.mxu0 0.0
      %461 = vmatmul.mubr.f32.gmra.mxu0 %v297
      %v462 = vpop.f32.mrf.mxu0
      %v463 = vadd.f32 %v319, %v462
      %v464 = vpop.f32.mrf.mxu0
      %465 = vdwg.mxu0
      %v466 = vmax.f32 %v388, 0.0
      %v467 = vmax.f32 %v393, 0.0
      %v468 = vmax.f32 %v398, 0.0
      %v469 = vmax.f32 %v403, 0.0
      %v470 = vmax.f32 %v408, 0.0
      %v471 = vmax.f32 %v413, 0.0
      %v472 = vmax.f32 %v418, 0.0
      %v473 = vmax.f32 %v423, 0.0
      %v474 = vmax.f32 %v428, 0.0
      %v475 = vmax.f32 %v433, 0.0
      %v476 = vmax.f32 %v438, 0.0
      %v477 = vmax.f32 %v443, 0.0
      %v478 = vmax.f32 %v448, 0.0
      %v479 = vmax.f32 %v453, 0.0
      %v480 = vmax.f32 %v458, 0.0
      %v481 = vmax.f32 %v463, 0.0
      %v482 = vld [vmem:[%s3] sm:$0xff]
      %v483 = vld [vmem:[%s3 + $0x8] sm:$0xff]
      %v484 = vld [vmem:[%s3 + $0x10] sm:$0xff]
      %v485 = vld [vmem:[%s3 + $0x18] sm:$0xff]
      %v486 = vld [vmem:[%s4] sm:$0x1]
      %v488 = vlaneseq
      %v489 = vshrl.u32 %v488, 7
      %v490 = vsub.s32 0, %v489
      %v491 = vrot.slane %v486, %v490
      %vm493 = vcmask 261120
      %v495 = vsel %vm493, %v466, 0
      %v498 = vsel %vm493, %v467, 0
      %v501 = vsel %vm493, %v468, 0
      %v504 = vsel %vm493, %v469, 0
      %v507 = vsel %vm493, %v470, 0
      %v510 = vsel %vm493, %v471, 0
      %v513 = vsel %vm493, %v472, 0
      %v516 = vsel %vm493, %v473, 0
      %v519 = vsel %vm493, %v474, 0
      %v522 = vsel %vm493, %v475, 0
      %v525 = vsel %vm493, %v476, 0
      %v528 = vsel %vm493, %v477, 0
      %v531 = vsel %vm493, %v478, 0
      %v534 = vsel %vm493, %v479, 0
      %v537 = vsel %vm493, %v480, 0
      %v540 = vsel %vm493, %v481, 0
      %542 = vmatprep.subr.mxu0 0.0
      %543 = vmatpush1.msra.mxu0 0.0
      %544 = vmatprep.subr.mxu0 0.0
      %545 = vmatpush1.msra.mxu0 0.0
      %546 = vmatprep.subr.mxu0 0.0
      %547 = vmatpush1.msra.mxu0 0.0
      %548 = vmatprep.subr.mxu0 0.0
      %549 = vmatpush1.msra.mxu0 0.0
      %550 = vmatprep.subr.mxu0 0.0
      %551 = vmatpush1.msra.mxu0 0.0
      %552 = vmatprep.subr.mxu0 0.0
      %553 = vmatpush1.msra.mxu0 0.0
      %554 = vmatprep.subr.mxu0 0.0
      %555 = vmatpush1.msra.mxu0 0.0
      %556 = vmatprep.subr.mxu0 0.0
      %557 = vmatpush1.msra.mxu0 0.0
      %558 = vmatprep.subr.mxu0 0.0
      %559 = vmatpush1.msra.mxu0 0.0
      %560 = vmatprep.subr.mxu0 0.0
      %561 = vmatpush1.msra.mxu0 0.0
      %562 = vmatprep.subr.mxu0 0.0
      %563 = vmatpush1.msra.mxu0 0.0
      %564 = vmatprep.subr.mxu0 0.0
      %565 = vmatpush1.msra.mxu0 0.0
      %566 = vmatprep.subr.mxu0 0.0
      %567 = vmatpush1.msra.mxu0 %v485
      %568 = vmatprep.subr.mxu0 0.0
      %569 = vmatpush1.msra.mxu0 %v484
      %570 = vmatprep.subr.mxu0 0.0
      %571 = vmatpush1.msra.mxu0 %v483
      %572 = vmatprep.subr.mxu0 0.0
      %573 = vmatpush1.msra.mxu0 %v482
      %574 = vmatprep.subr.mxu0 0.0
      %575 = vmatpush2.msra.mxu0 0.0
      %576 = vmatprep.subr.mxu0 0.0
      %577 = vmatpush2.msra.mxu0 0.0
      %578 = vmatprep.subr.mxu0 0.0
      %579 = vmatpush2.msra.mxu0 0.0
      %580 = vmatprep.subr.mxu0 0.0
      %581 = vmatpush2.msra.mxu0 0.0
      %582 = vmatprep.subr.mxu0 0.0
      %583 = vmatpush2.msra.mxu0 0.0
      %584 = vmatprep.subr.mxu0 0.0
      %585 = vmatpush2.msra.mxu0 0.0
      %586 = vmatprep.subr.mxu0 0.0
      %587 = vmatpush2.msra.mxu0 0.0
      %588 = vmatprep.subr.mxu0 0.0
      %589 = vmatpush2.msra.mxu0 0.0
      %590 = vmatprep.subr.mxu0 0.0
      %591 = vmatpush2.msra.mxu0 0.0
      %592 = vmatprep.subr.mxu0 0.0
      %593 = vmatpush2.msra.mxu0 0.0
      %594 = vmatprep.subr.mxu0 0.0
      %595 = vmatpush2.msra.mxu0 0.0
      %596 = vmatprep.subr.mxu0 0.0
      %597 = vmatpush2.msra.mxu0 0.0
      %598 = vmatprep.subr.mxu0 0.0
      %599 = vmatpush2.msra.mxu0 0.0
      %600 = vmatprep.subr.mxu0 0.0
      %601 = vmatpush2.msra.mxu0 0.0
      %602 = vmatprep.subr.mxu0 0.0
      %603 = vmatpush2.msra.mxu0 0.0
      %604 = vmatprep.subr.mxu0 0.0
      %605 = vmatpush2.msra.mxu0 0.0
      %606 = vmatprep.mubr.f32.mxu0 0.0
      %607 = vmatmul.mubr.f32.gmra.mxu0 %v495
      %v608 = vpop.f32.mrf.mxu0
      %v609 = vadd.f32 %v491, %v608
      %v610 = vpop.f32.mrf.mxu0
      %611 = vmatprep.mubr.f32.mxu0 0.0
      %612 = vmatmul.mubr.f32.gmra.mxu0 %v498
      %v613 = vpop.f32.mrf.mxu0
      %v614 = vadd.f32 %v491, %v613
      %v615 = vpop.f32.mrf.mxu0
      %616 = vmatprep.mubr.f32.mxu0 0.0
      %617 = vmatmul.mubr.f32.gmra.mxu0 %v501
      %v618 = vpop.f32.mrf.mxu0
      %v619 = vadd.f32 %v491, %v618
      %v620 = vpop.f32.mrf.mxu0
      %621 = vmatprep.mubr.f32.mxu0 0.0
      %622 = vmatmul.mubr.f32.gmra.mxu0 %v504
      %v623 = vpop.f32.mrf.mxu0
      %v624 = vadd.f32 %v491, %v623
      %v625 = vpop.f32.mrf.mxu0
      %626 = vmatprep.mubr.f32.mxu0 0.0
      %627 = vmatmul.mubr.f32.gmra.mxu0 %v507
      %v628 = vpop.f32.mrf.mxu0
      %v629 = vadd.f32 %v491, %v628
      %v630 = vpop.f32.mrf.mxu0
      %631 = vmatprep.mubr.f32.mxu0 0.0
      %632 = vmatmul.mubr.f32.gmra.mxu0 %v510
      %v633 = vpop.f32.mrf.mxu0
      %v634 = vadd.f32 %v491, %v633
      %v635 = vpop.f32.mrf.mxu0
      %636 = vmatprep.mubr.f32.mxu0 0.0
      %637 = vmatmul.mubr.f32.gmra.mxu0 %v513
      %v638 = vpop.f32.mrf.mxu0
      %v639 = vadd.f32 %v491, %v638
      %v640 = vpop.f32.mrf.mxu0
      %641 = vmatprep.mubr.f32.mxu0 0.0
      %642 = vmatmul.mubr.f32.gmra.mxu0 %v516
      %v643 = vpop.f32.mrf.mxu0
      %v644 = vadd.f32 %v491, %v643
      %v645 = vpop.f32.mrf.mxu0
      %646 = vmatprep.mubr.f32.mxu0 0.0
      %647 = vmatmul.mubr.f32.gmra.mxu0 %v519
      %v648 = vpop.f32.mrf.mxu0
      %v649 = vadd.f32 %v491, %v648
      %v650 = vpop.f32.mrf.mxu0
      %651 = vmatprep.mubr.f32.mxu0 0.0
      %652 = vmatmul.mubr.f32.gmra.mxu0 %v522
      %v653 = vpop.f32.mrf.mxu0
      %v654 = vadd.f32 %v491, %v653
      %v655 = vpop.f32.mrf.mxu0
      %656 = vmatprep.mubr.f32.mxu0 0.0
      %657 = vmatmul.mubr.f32.gmra.mxu0 %v525
      %v658 = vpop.f32.mrf.mxu0
      %v659 = vadd.f32 %v491, %v658
      %v660 = vpop.f32.mrf.mxu0
      %661 = vmatprep.mubr.f32.mxu0 0.0
      %662 = vmatmul.mubr.f32.gmra.mxu0 %v528
      %v663 = vpop.f32.mrf.mxu0
      %v664 = vadd.f32 %v491, %v663
      %v665 = vpop.f32.mrf.mxu0
      %666 = vmatprep.mubr.f32.mxu0 0.0
      %667 = vmatmul.mubr.f32.gmra.mxu0 %v531
      %v668 = vpop.f32.mrf.mxu0
      %v669 = vadd.f32 %v491, %v668
      %v670 = vpop.f32.mrf.mxu0
      %671 = vmatprep.mubr.f32.mxu0 0.0
      %672 = vmatmul.mubr.f32.gmra.mxu0 %v534
      %v673 = vpop.f32.mrf.mxu0
      %v674 = vadd.f32 %v491, %v673
      %v675 = vpop.f32.mrf.mxu0
      %676 = vmatprep.mubr.f32.mxu0 0.0
      %677 = vmatmul.mubr.f32.gmra.mxu0 %v537
      %v678 = vpop.f32.mrf.mxu0
      %v679 = vadd.f32 %v491, %v678
      %v680 = vpop.f32.mrf.mxu0
      %681 = vmatprep.mubr.f32.mxu0 0.0
      %682 = vmatmul.mubr.f32.gmra.mxu0 %v540
      %v683 = vpop.f32.mrf.mxu0
      %v684 = vadd.f32 %v491, %v683
      %v685 = vpop.f32.mrf.mxu0
      %686 = vdwg.mxu0
      %v687 = vmax.f32 %v609, 0.0
      %v688 = vmax.f32 %v614, 0.0
      %v689 = vmax.f32 %v619, 0.0
      %v690 = vmax.f32 %v624, 0.0
      %v691 = vmax.f32 %v629, 0.0
      %v692 = vmax.f32 %v634, 0.0
      %v693 = vmax.f32 %v639, 0.0
      %v694 = vmax.f32 %v644, 0.0
      %v695 = vmax.f32 %v649, 0.0
      %v696 = vmax.f32 %v654, 0.0
      %v697 = vmax.f32 %v659, 0.0
      %v698 = vmax.f32 %v664, 0.0
      %v699 = vmax.f32 %v669, 0.0
      %v700 = vmax.f32 %v674, 0.0
      %v701 = vmax.f32 %v679, 0.0
      %v702 = vmax.f32 %v684, 0.0
      %v719 = vrot.slane %v688, 7
      %vm720 = vcmask 1041409
      %v721 = vsel %vm720, %v719, %v687
      %v722 = vrot.slane %v689, 6
      %vm723 = vcmask 1042434
      %v724 = vsel %vm723, %v722, %v721
      %v725 = vrot.slane %v690, 5
      %vm726 = vcmask 1043459
      %v727 = vsel %vm726, %v725, %v724
      %v728 = vrot.slane %v691, 4
      %vm729 = vcmask 1044484
      %v730 = vsel %vm729, %v728, %v727
      %v731 = vrot.slane %v692, 3
      %vm732 = vcmask 1045509
      %v733 = vsel %vm732, %v731, %v730
      %v734 = vrot.slane %v693, 2
      %vm735 = vcmask 1046534
      %v736 = vsel %vm735, %v734, %v733
      %v737 = vrot.slane %v694, 1
      %vm738 = vcmask 1047559
      %v739 = vsel %vm738, %v737, %v736
      %v740 = vrot.slane %v696, 7
      %v741 = vsel %vm720, %v740, %v695
      %v742 = vrot.slane %v697, 6
      %v743 = vsel %vm723, %v742, %v741
      %v744 = vrot.slane %v698, 5
      %v745 = vsel %vm726, %v744, %v743
      %v746 = vrot.slane %v699, 4
      %v747 = vsel %vm729, %v746, %v745
      %v748 = vrot.slane %v700, 3
      %v749 = vsel %vm732, %v748, %v747
      %v750 = vrot.slane %v701, 2
      %v751 = vsel %vm735, %v750, %v749
      %v752 = vrot.slane %v702, 1
      %v753 = vsel %vm738, %v752, %v751
      %756 = vst.msk [vmem:[#allocation2] sm:$0xff] %vm493, %v739
      %757 = vst.msk [vmem:[#allocation2 + $0x10] sm:$0xff] %vm493, %v753
      %v758 = vrot.slane %v687, 1
      %v759 = vsel %vm720, %v688, %v758
      %v760 = vrot.slane %v689, 7
      %v761 = vsel %vm723, %v760, %v759
      %v762 = vrot.slane %v690, 6
      %v763 = vsel %vm726, %v762, %v761
      %v764 = vrot.slane %v691, 5
      %v765 = vsel %vm729, %v764, %v763
      %v766 = vrot.slane %v692, 4
      %v767 = vsel %vm732, %v766, %v765
      %v768 = vrot.slane %v693, 3
      %v769 = vsel %vm735, %v768, %v767
      %v770 = vrot.slane %v694, 2
      %v771 = vsel %vm738, %v770, %v769
      %v772 = vrot.slane %v695, 1
      %v773 = vsel %vm720, %v696, %v772
      %v774 = vrot.slane %v697, 7
      %v775 = vsel %vm723, %v774, %v773
      %v776 = vrot.slane %v698, 6
      %v777 = vsel %vm726, %v776, %v775
      %v778 = vrot.slane %v699, 5
      %v779 = vsel %vm729, %v778, %v777
      %v780 = vrot.slane %v700, 4
      %v781 = vsel %vm732, %v780, %v779
      %v782 = vrot.slane %v701, 3
      %v783 = vsel %vm735, %v782, %v781
      %v784 = vrot.slane %v702, 2
      %v785 = vsel %vm738, %v784, %v783
      %786 = vrot.lane.b32.xlu0 %v771, 32
      %v787 = vpop.permute.xlu0 %786
      %788 = vrot.lane.b32.xlu0 %v785, 32
      %v789 = vpop.permute.xlu0 %788
      %vm792 = vcmask 523520
      %793 = vst.msk [vmem:[#allocation2] sm:$0xff] %vm792, %v787
      %794 = vst.msk [vmem:[#allocation2 + $0x10] sm:$0xff] %vm792, %v789
      %v795 = vrot.slane %v687, 2
      %v796 = vrot.slane %v688, 1
      %v797 = vsel %vm720, %v796, %v795
      %v798 = vsel %vm723, %v689, %v797
      %v799 = vrot.slane %v690, 7
      %v800 = vsel %vm726, %v799, %v798
      %v801 = vrot.slane %v691, 6
      %v802 = vsel %vm729, %v801, %v800
      %v803 = vrot.slane %v692, 5
      %v804 = vsel %vm732, %v803, %v802
      %v805 = vrot.slane %v693, 4
      %v806 = vsel %vm735, %v805, %v804
      %v807 = vrot.slane %v694, 3
      %v808 = vsel %vm738, %v807, %v806
      %v809 = vrot.slane %v695, 2
      %v810 = vrot.slane %v696, 1
      %v811 = vsel %vm720, %v810, %v809
      %v812 = vsel %vm723, %v697, %v811
      %v813 = vrot.slane %v698, 7
      %v814 = vsel %vm726, %v813, %v812
      %v815 = vrot.slane %v699, 6
      %v816 = vsel %vm729, %v815, %v814
      %v817 = vrot.slane %v700, 5
      %v818 = vsel %vm732, %v817, %v816
      %v819 = vrot.slane %v701, 4
      %v820 = vsel %vm735, %v819, %v818
      %v821 = vrot.slane %v702, 3
      %v822 = vsel %vm738, %v821, %v820
      %823 = vrot.lane.b32.xlu0 %v808, 64
      %v824 = vpop.permute.xlu0 %823
      %825 = vrot.lane.b32.xlu0 %v822, 64
      %v826 = vpop.permute.xlu0 %825
      %vm829 = vcmask 785920
      %830 = vst.msk [vmem:[#allocation2] sm:$0xff] %vm829, %v824
      %831 = vst.msk [vmem:[#allocation2 + $0x10] sm:$0xff] %vm829, %v826
      %v832 = vrot.slane %v687, 3
      %v833 = vrot.slane %v688, 2
      %v834 = vsel %vm720, %v833, %v832
      %v835 = vrot.slane %v689, 1
      %v836 = vsel %vm723, %v835, %v834
      %v837 = vsel %vm726, %v690, %v836
      %v838 = vrot.slane %v691, 7
      %v839 = vsel %vm729, %v838, %v837
      %v840 = vrot.slane %v692, 6
      %v841 = vsel %vm732, %v840, %v839
      %v842 = vrot.slane %v693, 5
      %v843 = vsel %vm735, %v842, %v841
      %v844 = vrot.slane %v694, 4
      %v845 = vsel %vm738, %v844, %v843
      %v846 = vrot.slane %v695, 3
      %v847 = vrot.slane %v696, 2
      %v848 = vsel %vm720, %v847, %v846
      %v849 = vrot.slane %v697, 1
      %v850 = vsel %vm723, %v849, %v848
      %v851 = vsel %vm726, %v698, %v850
      %v852 = vrot.slane %v699, 7
      %v853 = vsel %vm729, %v852, %v851
      %v854 = vrot.slane %v700, 6
      %v855 = vsel %vm732, %v854, %v853
      %v856 = vrot.slane %v701, 5
      %v857 = vsel %vm735, %v856, %v855
      %v858 = vrot.slane %v702, 4
      %v859 = vsel %vm738, %v858, %v857
      %860 = vrot.lane.b32.xlu0 %v845, 96
      %v861 = vpop.permute.xlu0 %860
      %862 = vrot.lane.b32.xlu0 %v859, 96
      %v863 = vpop.permute.xlu0 %862
      %vm866 = vcmask 1048320
      %867 = vst.msk [vmem:[#allocation2] sm:$0xff] %vm866, %v861
      %868 = vst.msk [vmem:[#allocation2 + $0x10] sm:$0xff] %vm866, %v863
      %v869 = vrot.slane %v687, 4
      %v870 = vrot.slane %v688, 3
      %v871 = vsel %vm720, %v870, %v869
      %v872 = vrot.slane %v689, 2
      %v873 = vsel %vm723, %v872, %v871
      %v874 = vrot.slane %v690, 1
      %v875 = vsel %vm726, %v874, %v873
      %v876 = vsel %vm729, %v691, %v875
      %v877 = vrot.slane %v692, 7
      %v878 = vsel %vm732, %v877, %v876
      %v879 = vrot.slane %v693, 6
      %v880 = vsel %vm735, %v879, %v878
      %v881 = vrot.slane %v694, 5
      %v882 = vsel %vm738, %v881, %v880
      %v883 = vrot.slane %v695, 4
      %v884 = vrot.slane %v696, 3
      %v885 = vsel %vm720, %v884, %v883
      %v886 = vrot.slane %v697, 2
      %v887 = vsel %vm723, %v886, %v885
      %v888 = vrot.slane %v698, 1
      %v889 = vsel %vm726, %v888, %v887
      %v890 = vsel %vm729, %v699, %v889
      %v891 = vrot.slane %v700, 7
      %v892 = vsel %vm732, %v891, %v890
      %v893 = vrot.slane %v701, 6
      %v894 = vsel %vm735, %v893, %v892
      %v895 = vrot.slane %v702, 5
      %v896 = vsel %vm738, %v895, %v894
      %899 = vst.msk [vmem:[#allocation2 + $0x8] sm:$0xff] %vm493, %v882
      %900 = vst.msk [vmem:[#allocation2 + $0x18] sm:$0xff] %vm493, %v896
      %v901 = vrot.slane %v687, 5
      %v902 = vrot.slane %v688, 4
      %v903 = vsel %vm720, %v902, %v901
      %v904 = vrot.slane %v689, 3
      %v905 = vsel %vm723, %v904, %v903
      %v906 = vrot.slane %v690, 2
      %v907 = vsel %vm726, %v906, %v905
      %v908 = vrot.slane %v691, 1
      %v909 = vsel %vm729, %v908, %v907
      %v910 = vsel %vm732, %v692, %v909
      %v911 = vrot.slane %v693, 7
      %v912 = vsel %vm735, %v911, %v910
      %v913 = vrot.slane %v694, 6
      %v914 = vsel %vm738, %v913, %v912
      %v915 = vrot.slane %v695, 5
      %v916 = vrot.slane %v696, 4
      %v917 = vsel %vm720, %v916, %v915
      %v918 = vrot.slane %v697, 3
      %v919 = vsel %vm723, %v918, %v917
      %v920 = vrot.slane %v698, 2
      %v921 = vsel %vm726, %v920, %v919
      %v922 = vrot.slane %v699, 1
      %v923 = vsel %vm729, %v922, %v921
      %v924 = vsel %vm732, %v700, %v923
      %v925 = vrot.slane %v701, 7
      %v926 = vsel %vm735, %v925, %v924
      %v927 = vrot.slane %v702, 6
      %v928 = vsel %vm738, %v927, %v926
      %929 = vrot.lane.b32.xlu0 %v914, 32
      %v930 = vpop.permute.xlu0 %929
      %931 = vrot.lane.b32.xlu0 %v928, 32
      %v932 = vpop.permute.xlu0 %931
      %935 = vst.msk [vmem:[#allocation2 + $0x8] sm:$0xff] %vm792, %v930
      %936 = vst.msk [vmem:[#allocation2 + $0x18] sm:$0xff] %vm792, %v932
      %v937 = vrot.slane %v687, 6
      %v938 = vrot.slane %v688, 5
      %v939 = vsel %vm720, %v938, %v937
      %v940 = vrot.slane %v689, 4
      %v941 = vsel %vm723, %v940, %v939
      %v942 = vrot.slane %v690, 3
      %v943 = vsel %vm726, %v942, %v941
      %v944 = vrot.slane %v691, 2
      %v945 = vsel %vm729, %v944, %v943
      %v946 = vrot.slane %v692, 1
      %v947 = vsel %vm732, %v946, %v945
      %v948 = vsel %vm735, %v693, %v947
      %v949 = vrot.slane %v694, 7
      %v950 = vsel %vm738, %v949, %v948
      %v951 = vrot.slane %v695, 6
      %v952 = vrot.slane %v696, 5
      %v953 = vsel %vm720, %v952, %v951
      %v954 = vrot.slane %v697, 4
      %v955 = vsel %vm723, %v954, %v953
      %v956 = vrot.slane %v698, 3
      %v957 = vsel %vm726, %v956, %v955
      %v958 = vrot.slane %v699, 2
      %v959 = vsel %vm729, %v958, %v957
      %v960 = vrot.slane %v700, 1
      %v961 = vsel %vm732, %v960, %v959
      %v962 = vsel %vm735, %v701, %v961
      %v963 = vrot.slane %v702, 7
      %v964 = vsel %vm738, %v963, %v962
      %965 = vrot.lane.b32.xlu0 %v950, 64
      %v966 = vpop.permute.xlu0 %965
      %967 = vrot.lane.b32.xlu0 %v964, 64
      %v968 = vpop.permute.xlu0 %967
      %971 = vst.msk [vmem:[#allocation2 + $0x8] sm:$0xff] %vm829, %v966
      %972 = vst.msk [vmem:[#allocation2 + $0x18] sm:$0xff] %vm829, %v968
      %v973 = vrot.slane %v687, 7
      %v974 = vrot.slane %v688, 6
      %v975 = vsel %vm720, %v974, %v973
      %v976 = vrot.slane %v689, 5
      %v977 = vsel %vm723, %v976, %v975
      %v978 = vrot.slane %v690, 4
      %v979 = vsel %vm726, %v978, %v977
      %v980 = vrot.slane %v691, 3
      %v981 = vsel %vm729, %v980, %v979
      %v982 = vrot.slane %v692, 2
      %v983 = vsel %vm732, %v982, %v981
      %v984 = vrot.slane %v693, 1
      %v985 = vsel %vm735, %v984, %v983
      %v986 = vsel %vm738, %v694, %v985
      %v987 = vrot.slane %v695, 7
      %v988 = vrot.slane %v696, 6
      %v989 = vsel %vm720, %v988, %v987
      %v990 = vrot.slane %v697, 5
      %v991 = vsel %vm723, %v990, %v989
      %v992 = vrot.slane %v698, 4
      %v993 = vsel %vm726, %v992, %v991
      %v994 = vrot.slane %v699, 3
      %v995 = vsel %vm729, %v994, %v993
      %v996 = vrot.slane %v700, 2
      %v997 = vsel %vm732, %v996, %v995
      %v998 = vrot.slane %v701, 1
      %v999 = vsel %vm735, %v998, %v997
      %v1000 = vsel %vm738, %v702, %v999
      %1001 = vrot.lane.b32.xlu0 %v986, 96
      %v1002 = vpop.permute.xlu0 %1001
      %1003 = vrot.lane.b32.xlu0 %v1000, 96
      %v1004 = vpop.permute.xlu0 %1003
      %1007 = vst.msk [vmem:[#allocation2 + $0x8] sm:$0xff] %vm866, %v1002
      %1008 = vst.msk [vmem:[#allocation2 + $0x18] sm:$0xff] %vm866, %v1004
      %v1009 = vld [vmem:[#allocation2] sm:$0xff]
      %v1010 = vld [vmem:[#allocation2 + $0x8] sm:$0xff]
      %v1011 = vld [vmem:[#allocation2 + $0x10] sm:$0xff]
      %v1012 = vld [vmem:[#allocation2 + $0x18] sm:$0xff]
      %v1013 = vld [vmem:[%s5] sm:$0xff]
      %v1014 = vld [vmem:[%s5 + $0x8] sm:$0xff]
      %v1015 = vld [vmem:[%s5 + $0x10] sm:$0xff]
      %v1016 = vld [vmem:[%s5 + $0x18] sm:$0xff]
      %v1017 = vld [vmem:[%s5 + $0x20] sm:$0xff]
      %v1018 = vld [vmem:[%s5 + $0x28] sm:$0xff]
      %v1019 = vld [vmem:[%s5 + $0x30] sm:$0xff]
      %v1020 = vld [vmem:[%s5 + $0x38] sm:$0xff]
      %v1021 = vld [vmem:[%s5 + $0x40] sm:$0xff]
      %v1022 = vld [vmem:[%s5 + $0x48] sm:$0xff]
      %v1023 = vld [vmem:[%s5 + $0x50] sm:$0xff]
      %v1024 = vld [vmem:[%s5 + $0x58] sm:$0xff]
      %v1025 = vld [vmem:[%s5 + $0x60] sm:$0xff]
      %v1026 = vld [vmem:[%s5 + $0x68] sm:$0xff]
      %v1027 = vld [vmem:[%s5 + $0x70] sm:$0xff]
      %v1028 = vld [vmem:[%s5 + $0x78] sm:$0xff]
      %v1029 = vld [vmem:[%s5 + $0x80] sm:$0xff]
      %v1030 = vld [vmem:[%s5 + $0x88] sm:$0xff]
      %v1031 = vld [vmem:[%s5 + $0x90] sm:$0xff]
      %v1032 = vld [vmem:[%s5 + $0x98] sm:$0xff]
      %v1033 = vld [vmem:[%s5 + $0xa0] sm:$0xff]
      %v1034 = vld [vmem:[%s5 + $0xa8] sm:$0xff]
      %v1035 = vld [vmem:[%s5 + $0xb0] sm:$0xff]
      %v1036 = vld [vmem:[%s5 + $0xb8] sm:$0xff]
      %v1037 = vld [vmem:[%s5 + $0xc0] sm:$0xff]
      %v1038 = vld [vmem:[%s5 + $0xc8] sm:$0xff]
      %v1039 = vld [vmem:[%s5 + $0xd0] sm:$0xff]
      %v1040 = vld [vmem:[%s5 + $0xd8] sm:$0xff]
      %v1041 = vld [vmem:[%s5 + $0xe0] sm:$0xff]
      %v1042 = vld [vmem:[%s5 + $0xe8] sm:$0xff]
      %v1043 = vld [vmem:[%s5 + $0xf0] sm:$0xff]
      %v1044 = vld [vmem:[%s5 + $0xf8] sm:$0xff]
      %v1045 = vld [vmem:[%s6] sm:$0x1]
      %v1047 = vlaneseq
      %v1048 = vshrl.u32 %v1047, 7
      %v1049 = vsub.s32 0, %v1048
      %v1050 = vrot.slane %v1045, %v1049
      %1052 = vmatprep.subr.mxu0 0.0
      %1053 = vmatpush1.msra.mxu0 %v1028
      %1054 = vmatprep.subr.mxu0 0.0
      %1055 = vmatpush1.msra.mxu0 %v1027
      %1056 = vmatprep.subr.mxu0 0.0
      %1057 = vmatpush1.msra.mxu0 %v1026
      %1058 = vmatprep.subr.mxu0 0.0
      %1059 = vmatpush1.msra.mxu0 %v1025
      %1060 = vmatprep.subr.mxu0 0.0
      %1061 = vmatpush1.msra.mxu0 %v1024
      %1062 = vmatprep.subr.mxu0 0.0
      %1063 = vmatpush1.msra.mxu0 %v1023
      %1064 = vmatprep.subr.mxu0 0.0
      %1065 = vmatpush1.msra.mxu0 %v1022
      %1066 = vmatprep.subr.mxu0 0.0
      %1067 = vmatpush1.msra.mxu0 %v1021
      %1068 = vmatprep.subr.mxu0 0.0
      %1069 = vmatpush1.msra.mxu0 %v1020
      %1070 = vmatprep.subr.mxu0 0.0
      %1071 = vmatpush1.msra.mxu0 %v1019
      %1072 = vmatprep.subr.mxu0 0.0
      %1073 = vmatpush1.msra.mxu0 %v1018
      %1074 = vmatprep.subr.mxu0 0.0
      %1075 = vmatpush1.msra.mxu0 %v1017
      %1076 = vmatprep.subr.mxu0 0.0
      %1077 = vmatpush1.msra.mxu0 %v1016
      %1078 = vmatprep.subr.mxu0 0.0
      %1079 = vmatpush1.msra.mxu0 %v1015
      %1080 = vmatprep.subr.mxu0 0.0
      %1081 = vmatpush1.msra.mxu0 %v1014
      %1082 = vmatprep.subr.mxu0 0.0
      %1083 = vmatpush1.msra.mxu0 %v1013
      %1084 = vmatprep.subr.mxu0 0.0
      %1085 = vmatpush2.msra.mxu0 %v1044
      %1086 = vmatprep.subr.mxu0 0.0
      %1087 = vmatpush2.msra.mxu0 %v1043
      %1088 = vmatprep.subr.mxu0 0.0
      %1089 = vmatpush2.msra.mxu0 %v1042
      %1090 = vmatprep.subr.mxu0 0.0
      %1091 = vmatpush2.msra.mxu0 %v1041
      %1092 = vmatprep.subr.mxu0 0.0
      %1093 = vmatpush2.msra.mxu0 %v1040
      %1094 = vmatprep.subr.mxu0 0.0
      %1095 = vmatpush2.msra.mxu0 %v1039
      %1096 = vmatprep.subr.mxu0 0.0
      %1097 = vmatpush2.msra.mxu0 %v1038
      %1098 = vmatprep.subr.mxu0 0.0
      %1099 = vmatpush2.msra.mxu0 %v1037
      %1100 = vmatprep.subr.mxu0 0.0
      %1101 = vmatpush2.msra.mxu0 %v1036
      %1102 = vmatprep.subr.mxu0 0.0
      %1103 = vmatpush2.msra.mxu0 %v1035
      %1104 = vmatprep.subr.mxu0 0.0
      %1105 = vmatpush2.msra.mxu0 %v1034
      %1106 = vmatprep.subr.mxu0 0.0
      %1107 = vmatpush2.msra.mxu0 %v1033
      %1108 = vmatprep.subr.mxu0 0.0
      %1109 = vmatpush2.msra.mxu0 %v1032
      %1110 = vmatprep.subr.mxu0 0.0
      %1111 = vmatpush2.msra.mxu0 %v1031
      %1112 = vmatprep.subr.mxu0 0.0
      %1113 = vmatpush2.msra.mxu0 %v1030
      %1114 = vmatprep.subr.mxu0 0.0
      %1115 = vmatpush2.msra.mxu0 %v1029
      %1116 = vmatprep.mubr.f32.mxu0 %v1010
      %1117 = vmatmul.mubr.f32.gmra.mxu0 %v1009
      %v1118 = vpop.f32.mrf.mxu0
      %v1119 = vadd.f32 %v1050, %v1118
      %v1120 = vpop.f32.mrf.mxu0
      %1121 = vmatprep.mubr.f32.mxu0 %v1012
      %1122 = vmatmul.mubr.f32.gmra.mxu0 %v1011
      %v1123 = vpop.f32.mrf.mxu0
      %v1124 = vadd.f32 %v1050, %v1123
      %v1125 = vpop.f32.mrf.mxu0
      %1126 = vdwg.mxu0
      %1127 = vmax.xlane.f32.xlu0 %v1119
      %v1128 = vpop.xlane.xlu0 %1127
      %1129 = vmax.xlane.f32.xlu0 %v1124
      %v1130 = vpop.xlane.xlu0 %1129
      %v1131 = vsub.f32 %v1119, %v1128
      %v1132 = vsub.f32 %v1124, %v1130
      %v1133 = vmul.f32 %v1131, 1.442695
      %v1134 = vpow.pop %v1133
      %v1135 = vmul.f32 %v1132, 1.442695
      %v1136 = vpow.pop %v1135
      %1137 = vadd.xlane.f32.xlu0 %v1134
      %v1138 = vpop.xlane.xlu0 %1137
      %1139 = vadd.xlane.f32.xlu0 %v1136
      %v1140 = vpop.xlane.xlu0 %1139
      %v1141 = vlog2.pop %v1138
      %v1142 = vmul.f32 %v1141, 0.6931472
      %v1143 = vlog2.pop %v1140
      %v1144 = vmul.f32 %v1143, 0.6931472
      %v1145 = vsub.f32 %v1131, %v1142
      %v1146 = vsub.f32 %v1132, %v1144
      %1147 = vst [vmem:[%s280] sm:$0xff] %v1145
      %1148 = vst [vmem:[%s280 + $0x8] sm:$0xff] %v1146
      %s1149 = smul.u32 2, %s18
      %p1150 = scmp.lt.s32.totalorder %s1149, 7
      %s1151 = scalar_select %p1150, %s1149, 7
      %s1152 = smul.addr %s1151, 8
      %s1153 = scalar_lea.vmem %s7, %s1152
      // Predicated region
      $region49: #{batch_pscn_forward.1} parent=47 // pred_check
        %p1154 = pneg %p188
      $region50: #{batch_pscn_forward.1} parent=47 // pred_check_branch
        %1156 = sbr.rel (%p1154) target = $region52
      $region51: #{batch_pscn_forward.1} parent=47 // pred_region
        %s1157 = smul.u32 2, %s18
      $region52: #{batch_pscn_forward.1} parent=47 // pred_fallthru
        _
    $region48: #{batch_pscn_forward.1} parent=5 // pred_fallthru
      _
    %p1158 = scmp.le.s32.totalorder 2, %s13
    // Predicated region
    $region53: #{batch_pscn_forward.1} parent=5 // pred_check
      %p1159 = pneg %p1158
    $region54: #{batch_pscn_forward.1} parent=5 // pred_check_branch
      %1161 = sbr.rel (%p1159) target = $region56
    $region55: #{batch_pscn_forward.1} parent=5 // pred_region
      %s1162 = ssub.s32 %s13, 2
      // Predicated region
      $region57: #{batch_pscn_forward.1} parent=55 // pred_check
        %p1163 = pneg %p194
      $region58: #{batch_pscn_forward.1} parent=55 // pred_check_branch
        %1165 = sbr.rel (%p1163) target = $region60
      $region59: #{batch_pscn_forward.1} parent=55 // pred_region
        %s1166 = smul.u32 2, %s19
        %p1167 = scmp.lt.s32.totalorder %s1166, 7
        %s1168 = scalar_select %p1167, %s1166, 7
        %s1169 = smul.addr %s1168, 8
        %s1170 = scalar_lea.vmem %s7, %s1169
      $region60: #{batch_pscn_forward.1} parent=55 // pred_fallthru
        _
    $region56: #{batch_pscn_forward.1} parent=5 // pred_fallthru
      _
  $region6: #{batch_pscn_forward.1} parent=0 // loop_footer
    %s17 = sadd.s32 1, %s13
  $region7: #{batch_pscn_forward.1} parent=0 // loop_footer_branch
    %12 = sbr.rel target = $region3
  $region8: #{batch_pscn_forward.1} parent=0 // loop_exit
    _

</llo_original>
